<compile_context>
chip_gen: v7x
topology: tpu7x:2x2x1
jax: 0.10.0
libtpu: 0.0.40
codegen_flags: <defaults>
</compile_context>

<pallas_src>
import functools
import math

import jax
import jax.numpy as jnp
import numpy as np
from jax.experimental import pallas as pl
from jax.experimental.pallas import tpu as pltpu


# ---------------------------------------------------------------------------
# Kernels
# ---------------------------------------------------------------------------
def _dense_kernel(x_ref, w_ref, b_ref, o_ref):
    # x_ref: (tm, width)        lane-dense row tile
    # w_ref: (width, width)     block-diagonal weight, VMEM-resident
    # b_ref: (1, width)         flattened bias, VMEM-resident
    # o_ref: (tm, width)        lane-dense output tile
    y = jnp.dot(x_ref[...], w_ref[...], preferred_element_type=jnp.float32)
    o_ref[...] = (y + b_ref[...].astype(jnp.float32)).astype(o_ref.dtype)


def _block_kernel(x_ref, w_ref, b_ref, o_ref, *, num_blocks, bw):
    # Per-block path (used when bw % 128 == 0): static Ref slices are free
    # views; each block result is stored straight into o_ref (no concat slab).
    for h in range(num_blocks):
        lo, hi = h * bw, (h + 1) * bw
        yh = jnp.dot(x_ref[:, lo:hi], w_ref[h],
                     preferred_element_type=jnp.float32)
        o_ref[:, lo:hi] = (
            yh + b_ref[:, lo:hi].astype(jnp.float32)).astype(o_ref.dtype)


# ---------------------------------------------------------------------------
# Helpers
# ---------------------------------------------------------------------------
def _round_up(x, m):
    return ((x + m - 1) // m) * m


def _vmem_capacity_bytes():
    try:
        return int(pltpu.get_tpu_info().vmem_capacity_bytes)
    except Exception:
        return 64 * 1024 * 1024  # conservative: v7x per-TensorCore VMEM


def _densify(w):
    """[h, bw, bw] -> [h*bw, h*bw] block-diagonal matrix (built once, in XLA)."""
    num_blocks, bw, _ = w.shape
    eye = jnp.eye(num_blocks, dtype=w.dtype)
    wd = jnp.einsum('hij,hk->hikj', w, eye)
    return wd.reshape(num_blocks * bw, num_blocks * bw)


def _choose_tm(M, width, citems, oitems, resident_bytes, vmem_limit_bytes):
    """Row-tile size from a generation-aware VMEM budget."""
    pack = {1: 32, 2: 16}.get(citems, 8)            # sublane packing of compute dtype
    budget = max(vmem_limit_bytes - (8 << 20), 4 << 20)   # Mosaic scratch headroom
    # w/b are double-buffered by Pallas even with a constant index_map.
    avail = max(budget - 2 * resident_bytes, 1 << 20)
    # double-buffered in tile + double-buffered out tile + f32 dot intermediate
    per_row = width * (2 * citems + 2 * oitems + 4)
    tm = int(avail // per_row)
    tm = min(tm, 4096)
    # Keep >= 2 (ideally 4) grid steps on big problems so v7x megacore can split.
    if M >= 4096:
        min_steps = 4
    elif M >= 512:
        min_steps = 2
    else:
        min_steps = 1
    tm = min(tm, _round_up(pl.cdiv(M, min_steps), pack))
    tm = max(pack, (tm // pack) * pack)
    if tm >= M:
        tm = M                                       # full-array block dim is always legal
    return tm


# ---------------------------------------------------------------------------
# Wrapper
# ---------------------------------------------------------------------------
def block_diagonal_linear(x, w, b, *, compute_dtype=None):
    """Pallas implementation of BlockDiagonalLinear.forward.

    Args:
      x: [..., width] input.
      w: [num_blocks, block_width, block_width] weights.
      b: [num_blocks, block_width] bias.
      compute_dtype: optional dtype (e.g. jnp.bfloat16) for x/w/b to halve HBM
        traffic; accumulation stays f32 and the output keeps x.dtype.
    Returns:
      [..., width] output, same dtype as x.
    """
    num_blocks, bw, _ = w.shape
    orig_shape = x.shape
    width = orig_shape[-1]
    assert width == num_blocks * bw

    out_dtype = x.dtype
    cdtype = jnp.dtype(compute_dtype) if compute_dtype is not None else jnp.dtype(x.dtype)
    citems = cdtype.itemsize
    oitems = jnp.dtype(out_dtype).itemsize

    M = int(np.prod(orig_shape[:-1])) if len(orig_shape) > 1 else 1

    x2 = x.reshape(M, width).astype(cdtype)    # metadata-only reshape, no transpose
    b2 = b.reshape(1, width).astype(cdtype)
    w_c = w.astype(cdtype)

    # Densify when bw < 128-multiple: single unmasked MXU matmul per tile.
    # Guard: dense weight stays VMEM-resident and the num_blocks x extra MXU
    # flops remain cheaper than the tile DMA (conservative cross-gen bound).
    dense_width_cap = 1024 if citems >= 4 else 512
    use_dense = (bw % 128 != 0) and (width <= dense_width_cap)

    if use_dense:
        w_in = _densify(w_c)
        w_spec = pl.BlockSpec((width, width), lambda i: (0, 0))
        resident = width * width * citems + width * citems
        kernel = _dense_kernel
    else:
        w_in = w_c
        w_spec = pl.BlockSpec((num_blocks, bw, bw), lambda i: (0, 0, 0))
        resident = num_blocks * bw * bw * citems + width * citems
        kernel = functools.partial(_block_kernel, num_blocks=num_blocks, bw=bw)

    vmem_cap = _vmem_capacity_bytes()
    vmem_limit = min(int(vmem_cap * 3 // 4), 96 * 1024 * 1024)   # 48 MiB on v7x, 96 MiB on v5e/v6e
    tm = _choose_tm(M, width, citems, oitems, resident, vmem_limit)
    grid = (pl.cdiv(M, tm),)

    out = pl.pallas_call(
        kernel,
        out_shape=jax.ShapeDtypeStruct((M, width), out_dtype),
        grid_spec=pltpu.PrefetchScalarGridSpec(
            num_scalar_prefetch=0,
            grid=grid,
            in_specs=[
                pl.BlockSpec((tm, width), lambda i: (i, 0)),   # x row tile
                w_spec,                                        # weights, VMEM-resident
                pl.BlockSpec((1, width), lambda i: (0, 0)),    # bias, VMEM-resident
            ],
            out_specs=pl.BlockSpec((tm, width), lambda i: (i, 0)),
        ),
        compiler_params=pltpu.CompilerParams(
            dimension_semantics=("parallel",),
            vmem_limit_bytes=vmem_limit,
        ),
    )(x2, w_in, b2)

    return out.reshape(orig_shape)


# ---------------------------------------------------------------------------
# Reference / init / test
# ---------------------------------------------------------------------------
def init_params(key, width, num_blocks, w_init_variance_scale=1.0,
                dtype=jnp.float32):
    """Deterministic parameter init matching the PyTorch module."""
    block_width = width // num_blocks
    std = math.sqrt(w_init_variance_scale / block_width)
    kw, _ = jax.random.split(key)
    w = (std * jax.random.normal(
        kw, (num_blocks, block_width, block_width))).astype(dtype)
    b = jnp.zeros((num_blocks, block_width), dtype=dtype)
    return w, b


def _reference(x, w, b):
    num_blocks, bw, _ = w.shape
    xr = x.reshape(x.shape[:-1] + (num_blocks, bw))
    y = jnp.einsum("...hi,hij->...hj", xr, w) + b
    return y.reshape(x.shape)


if __name__ == "__main__":
    key = jax.random.PRNGKey(0)
    kx, kp, kx2, kp2 = jax.random.split(key, 4)

    # --- Case 1: small block width (dense-weight path), f32 compute ---------
    batch, seq, width, num_blocks = 2, 8, 32, 4
    x = jax.random.normal(kx, (batch, seq, width), dtype=jnp.float32)
    w, b = init_params(kp, width, num_blocks, w_init_variance_scale=1.0)

    out = jax.block_until_ready(block_diagonal_linear(x, w, b))
    ref = _reference(x, w, b)
    assert out.shape == (batch, seq, width)
    assert out.dtype == x.dtype
    np.testing.assert_allclose(np.asarray(out), np.asarray(ref),
                               rtol=1e-5, atol=1e-5)

    # Same case with bf16 compute (halved HBM traffic); looser tolerance since
    # inputs are quantized (accumulation remains f32).
    out_bf16 = jax.block_until_ready(
        block_diagonal_linear(x, w, b, compute_dtype=jnp.bfloat16))
    np.testing.assert_allclose(np.asarray(out_bf16), np.asarray(ref),
                               rtol=3e-2, atol=3e-2)

    # --- Case 2: bw == 128 (per-block loop path), f32 compute ---------------
    width2, num_blocks2 = 256, 2
    x2 = jax.random.normal(kx2, (batch, seq, width2), dtype=jnp.float32)
    w2, b2 = init_params(kp2, width2, num_blocks2, w_init_variance_scale=1.0)

    out2 = jax.block_until_ready(block_diagonal_linear(x2, w2, b2))
    ref2 = _reference(x2, w2, b2)
    np.testing.assert_allclose(np.asarray(out2), np.asarray(ref2),
                               rtol=1e-5, atol=1e-5)

    print("KERNEL_OK")
</pallas_src>

<mosaic_0001>
module attributes {stable_mosaic.version = 11 : i64} {
  func.func @_dense_kernel(%arg0: i32, %arg1: memref<16x32xf32, #tpu.memory_space<vmem>>, %arg2: memref<32x32xf32, #tpu.memory_space<vmem>>, %arg3: memref<1x32xf32, #tpu.memory_space<vmem>>, %arg4: memref<16x32xf32, #tpu.memory_space<vmem>>) attributes {dimension_semantics = [#tpu.dimension_semantics<parallel>], iteration_bounds = array<i64: 1>, scalar_prefetch = 0 : i64, scratch_operands = 0 : i64, tpu.core_type = #tpu.core_type<tc>, window_params = [{transform_indices = @transform_0, window_bounds = array<i64: 16, 32>}, {pipeline_mode = #tpu.pipeline_mode<synchronous>, transform_indices = @transform_1, window_bounds = array<i64: 32, 32>}, {pipeline_mode = #tpu.pipeline_mode<synchronous>, transform_indices = @transform_2, window_bounds = array<i64: 1, 32>}, {transform_indices = @transform_3, window_bounds = array<i64: 16, 32>}]} {
    %c0 = arith.constant 0 : index
    %c0_0 = arith.constant 0 : index
    %0 = vector.load %arg1[%c0, %c0_0] : memref<16x32xf32, #tpu.memory_space<vmem>>, vector<16x32xf32>
    %c0_1 = arith.constant 0 : index
    %c0_2 = arith.constant 0 : index
    %1 = vector.load %arg2[%c0_1, %c0_2] : memref<32x32xf32, #tpu.memory_space<vmem>>, vector<32x32xf32>
    %cst = arith.constant dense<0.000000e+00> : vector<16x32xf32>
    %2 = tpu.matmul %0, %1, %cst {dimension_numbers = #tpu.dot_dimension_numbers<[1], [0], [0], [1], [0, 0, 1, 1], [], []>} : vector<16x32xf32>, vector<32x32xf32>, vector<16x32xf32> -> vector<16x32xf32>
    %c0_3 = arith.constant 0 : index
    %c0_4 = arith.constant 0 : index
    %3 = vector.load %arg3[%c0_3, %c0_4] : memref<1x32xf32, #tpu.memory_space<vmem>>, vector<1x32xf32>
    %4 = vector.broadcast %3 : vector<1x32xf32> to vector<16x32xf32>
    %5 = arith.addf %2, %4 : vector<16x32xf32>
    %c0_5 = arith.constant 0 : index
    %c0_6 = arith.constant 0 : index
    %6 = vector.load %arg4[%c0_5, %c0_6] : memref<16x32xf32, #tpu.memory_space<vmem>>, vector<16x32xf32>
    tpu.vector_store %arg4[%c0_5, %c0_6], %5 {strides = array<i32>} : memref<16x32xf32, #tpu.memory_space<vmem>>, vector<16x32xf32>,
    return
  }
  func.func @transform_0(%arg0: i32) -> (i32, i32) {
    %c0_i32 = arith.constant 0 : i32
    %c0_i32_0 = arith.constant 0 : i32
    return %arg0, %c0_i32 : i32, i32
  }
  func.func @transform_1(%arg0: i32) -> (i32, i32) {
    %c0_i32 = arith.constant 0 : i32
    %c0_i32_0 = arith.constant 0 : i32
    %c0_i32_1 = arith.constant 0 : i32
    return %c0_i32, %c0_i32_0 : i32, i32
  }
  func.func @transform_2(%arg0: i32) -> (i32, i32) {
    %c0_i32 = arith.constant 0 : i32
    %c0_i32_0 = arith.constant 0 : i32
    %c0_i32_1 = arith.constant 0 : i32
    return %c0_i32, %c0_i32_0 : i32, i32
  }
  func.func @transform_3(%arg0: i32) -> (i32, i32) {
    %c0_i32 = arith.constant 0 : i32
    %c0_i32_0 = arith.constant 0 : i32
    return %arg0, %c0_i32 : i32, i32
  }
}

</mosaic_0001>

<llo_original>
// kernel: tpu_custom_call.1
$region0: #{tpu_custom_call.1}
  #allocation0 [shape = 'u32[]', space=smem, size = 0x4, offset = 0x4, fixed_abs, tag = 'smem constant byte address 0x4 - core index']
  #allocation1 [shape = 'u32[144,128]{1,0:T(1,128)}', space=vmem, size = 0x12000, scoped, tag = 'internal scratch']
  %s0 = inlined_call_operand.hbm [shape: f32[16,32], index: 0, kind: input, shape index: {}]
  %s1 = inlined_call_operand.hbm [shape: f32[32,32], index: 1, kind: input, shape index: {}]
  %s2 = inlined_call_operand.vmem [shape: f32[1,32], index: 2, kind: input, shape index: {}]
  %s3 = inlined_call_operand.hbm [shape: f32[16,32], index: 3, kind: output, shape index: {}]
  %s4 = sld [smem:[#allocation0]]
  $region30: #{tpu_custom_call.1} parent=0
    _
  %s6 = ssub.s32 1, %s4
  %s7 = scalar_select 0, %s6, %s4
  $region1: #{tpu_custom_call.1} parent=0
    #allocation2 [shape = 'u8[8192]{0}', space=vmem, size = 0x2000, scoped, tag = 'input window, operand 0, single buffered']
    #allocation3 [shape = 's32[1]{0}', space=sflag, size = 0x4, scoped, tag = 'scoped memory for tpu_custom_call.1']
    #allocation4 [shape = 's32[1]{0}', space=sflag, size = 0x4, scoped, tag = 'scoped memory for tpu_custom_call.1']
    #allocation5 [shape = 'u8[16384]{0}', space=vmem, size = 0x4000, scoped, tag = 'input window, operand 1, single buffered']
    #allocation6 [shape = 's32[1]{0}', space=sflag, size = 0x4, scoped, tag = 'scoped memory for tpu_custom_call.1']
    #allocation7 [shape = 'u8[8192]{0}', space=vmem, size = 0x2000, scoped, tag = 'output window, operand 0, single buffered']
    %8 = vsyncpa [#allocation3], 0
    %9 = vsyncpa [#allocation6], 0
    %10 = vsyncpa [#allocation4], 0
    // Predicated region
    $region2: #{tpu_custom_call.1} parent=1 // pred_check
      _
    $region3: #{tpu_custom_call.1} parent=1 // pred_check_branch
      %12 = sbr.rel (0) target = $region5
    $region4: #{tpu_custom_call.1} parent=1 // pred_region
      %s14 = ssub.s32 256, 256
      %15 = vsyncadd [#allocation3], %s14
      %s16 = sshll.u32 [#allocation2], 4
      %s17 = int_to_ptr.vmem [resolvable:$true] %s16
      %22 = dma.hbm_to_vmem [thread:$0]  %s0, 256, %s17, [#allocation3], 128, 128, 8
    $region5: #{tpu_custom_call.1} parent=1 // pred_fallthru
      _
    // Predicated region
    $region6: #{tpu_custom_call.1} parent=1 // pred_check
      _
    $region7: #{tpu_custom_call.1} parent=1 // pred_check_branch
      %24 = sbr.rel (0) target = $region9
    $region8: #{tpu_custom_call.1} parent=1 // pred_region
      %s26 = ssub.s32 512, 512
      %27 = vsyncadd [#allocation6], %s26
      %s28 = sshll.u32 [#allocation5], 4
      %s29 = int_to_ptr.vmem [resolvable:$true] %s28
      %34 = dma.hbm_to_vmem [thread:$0]  %s1, 512, %s29, [#allocation6], 128, 128, 8
    $region9: #{tpu_custom_call.1} parent=1 // pred_fallthru
      _
    // Predicated region
    $region10: #{tpu_custom_call.1} parent=1 // pred_check
      _
    $region11: #{tpu_custom_call.1} parent=1 // pred_check_branch
      %36 = sbr.rel (0) target = $region13
    $region12: #{tpu_custom_call.1} parent=1 // pred_region
      _
    $region13: #{tpu_custom_call.1} parent=1 // pred_fallthru
      _
    // Predicated region
    $region14: #{tpu_custom_call.1} parent=1 // pred_check
      _
    $region15: #{tpu_custom_call.1} parent=1 // pred_check_branch
      %38 = sbr.rel (0) target = $region17
    $region16: #{tpu_custom_call.1} parent=1 // pred_region
      %39 = dma.done [#allocation3], 256
    $region17: #{tpu_custom_call.1} parent=1 // pred_fallthru
      _
    // Predicated region
    $region18: #{tpu_custom_call.1} parent=1 // pred_check
      _
    $region19: #{tpu_custom_call.1} parent=1 // pred_check_branch
      %41 = sbr.rel (0) target = $region21
    $region20: #{tpu_custom_call.1} parent=1 // pred_region
      %42 = dma.done [#allocation6], 512
    $region21: #{tpu_custom_call.1} parent=1 // pred_fallthru
      _
    %v43 = vld [vmem:[#allocation2] sm:$0xff]
    %v44 = vld [vmem:[#allocation2 + $0x8] sm:$0xff]
    %v45 = vld [vmem:[#allocation5] sm:$0xff]
    %v46 = vld [vmem:[#allocation5 + $0x8] sm:$0xff]
    %v47 = vld [vmem:[#allocation5 + $0x10] sm:$0xff]
    %v48 = vld [vmem:[#allocation5 + $0x18] sm:$0xff]
    %v49 = vld [vmem:[%s2] sm:$0x1]
    %v51 = vlaneseq
    %v52 = vshrl.u32 %v51, 7
    %v53 = vsub.s32 0, %v52
    %v54 = vrot.slane %v49, %v53
    %vm56 = vcmask 261120
    %v58 = vsel %vm56, %v43, 0
    %v61 = vsel %vm56, %v44, 0
    %63 = vmatprep.subr.mxu0 0.0
    %64 = vmatpush1.msra.mxu0 %v45
    %65 = vmatprep.subr.mxu0 0.0
    %66 = vmatpush1.msra.mxu0 %v46
    %67 = vmatprep.subr.mxu0 0.0
    %68 = vmatpush1.msra.mxu0 %v47
    %69 = vmatprep.subr.mxu0 0.0
    %70 = vmatpush1.msra.mxu0 %v48
    %71 = vmatprep.subr.mxu0 0.0
    %72 = vmatpush1.msra.mxu0 0.0
    %73 = vmatprep.subr.mxu0 0.0
    %74 = vmatpush1.msra.mxu0 0.0
    %75 = vmatprep.subr.mxu0 0.0
    %76 = vmatpush1.msra.mxu0 0.0
    %77 = vmatprep.subr.mxu0 0.0
    %78 = vmatpush1.msra.mxu0 0.0
    %79 = vmatprep.subr.mxu0 0.0
    %80 = vmatpush1.msra.mxu0 0.0
    %81 = vmatprep.subr.mxu0 0.0
    %82 = vmatpush1.msra.mxu0 0.0
    %83 = vmatprep.subr.mxu0 0.0
    %84 = vmatpush1.msra.mxu0 0.0
    %85 = vmatprep.subr.mxu0 0.0
    %86 = vmatpush1.msra.mxu0 0.0
    %87 = vmatprep.subr.mxu0 0.0
    %88 = vmatpush1.msra.mxu0 0.0
    %89 = vmatprep.subr.mxu0 0.0
    %90 = vmatpush1.msra.mxu0 0.0
    %91 = vmatprep.subr.mxu0 0.0
    %92 = vmatpush1.msra.mxu0 0.0
    %93 = vmatprep.subr.mxu0 0.0
    %94 = vmatpush1.msra.mxu0 0.0
    %95 = vmatprep.subr.mxu0 0.0
    %96 = vmatpush1.msra.mxu0 0.0
    %97 = vmatprep.subr.mxu0 0.0
    %98 = vmatpush1.msra.mxu0 0.0
    %99 = vmatprep.subr.mxu0 0.0
    %100 = vmatpush1.msra.mxu0 0.0
    %101 = vmatprep.subr.mxu0 0.0
    %102 = vmatpush1.msra.mxu0 0.0
    %103 = vmatprep.subr.mxu0 0.0
    %104 = vmatpush1.msra.mxu0 0.0
    %105 = vmatprep.subr.mxu0 0.0
    %106 = vmatpush1.msra.mxu0 0.0
    %107 = vmatprep.subr.mxu0 0.0
    %108 = vmatpush1.msra.mxu0 0.0
    %109 = vmatprep.subr.mxu0 0.0
    %110 = vmatpush1.msra.mxu0 0.0
    %111 = vmatprep.subr.mxu0 0.0
    %112 = vmatpush1.msra.mxu0 0.0
    %113 = vmatprep.subr.mxu0 0.0
    %114 = vmatpush1.msra.mxu0 0.0
    %115 = vmatprep.subr.mxu0 0.0
    %116 = vmatpush1.msra.mxu0 0.0
    %117 = vmatprep.subr.mxu0 0.0
    %118 = vmatpush1.msra.mxu0 0.0
    %119 = vmatprep.subr.mxu0 0.0
    %120 = vmatpush1.msra.mxu0 0.0
    %121 = vmatprep.subr.mxu0 0.0
    %122 = vmatpush1.msra.mxu0 0.0
    %123 = vmatprep.subr.mxu0 0.0
    %124 = vmatpush1.msra.mxu0 0.0
    %125 = vmatprep.subr.mxu0 0.0
    %126 = vmatpush1.msra.mxu0 0.0
    %127 = vmatprep.mubr.f32.mxu0 0.0
    %128 = vmatmul.mubr.f32.gmra.mrb[0].mxu0 %v58
    %v129 = vpop.f32.mrb[0].mxu0
    %v130 = vadd.f32 %v54, %v129
    %v131 = vpop.f32.mrb[0].mxu0
    %132 = vmatprep.mubr.f32.mxu0 0.0
    %133 = vmatmul.mubr.f32.gmra.mrb[0].mxu0 %v61
    %v134 = vpop.f32.mrb[0].mxu0
    %v135 = vadd.f32 %v54, %v134
    %v136 = vpop.f32.mrb[0].mxu0
    %137 = vdwg.mxu0
    %138 = vst.msk [vmem:[#allocation7] sm:$0xff] %vm56, %v130
    %139 = vst.msk [vmem:[#allocation7 + $0x8] sm:$0xff] %vm56, %v135
    // Predicated region
    $region22: #{tpu_custom_call.1} parent=1 // pred_check
      _
    $region23: #{tpu_custom_call.1} parent=1 // pred_check_branch
      %141 = sbr.rel (0) target = $region25
    $region24: #{tpu_custom_call.1} parent=1 // pred_region
      %s143 = ssub.s32 256, 256
      %144 = vsyncadd [#allocation4], %s143
      %s145 = sshll.u32 [#allocation7], 4
      %s146 = int_to_ptr.vmem [resolvable:$true] %s145
      %151 = dma.vmem_to_hbm [thread:$0]  %s146, 256, %s3, [#allocation4], 128, 128, 8
    $region25: #{tpu_custom_call.1} parent=1 // pred_fallthru
      _
    // Predicated region
    $region26: #{tpu_custom_call.1} parent=1 // pred_check
      _
    $region27: #{tpu_custom_call.1} parent=1 // pred_check_branch
      %153 = sbr.rel (0) target = $region29
    $region28: #{tpu_custom_call.1} parent=1 // pred_region
      %154 = dma.done [#allocation4], 256
    $region29: #{tpu_custom_call.1} parent=1 // pred_fallthru
      _
    %155 = vsyncpa [#allocation3], 1
    %156 = vsyncpa [#allocation6], 1
    %157 = vsyncpa [#allocation4], 1

</llo_original>
